<compile_context>
chip_gen: v7x
topology: tpu7x:2x2x1
jax: 0.10.0
libtpu: 0.0.40
codegen_flags: <defaults>
</compile_context>

<pallas_src>
import jax
import jax.numpy as jnp
from jax.experimental import pallas as pl
from jax.experimental.pallas import tpu as pltpu


def critic_kernel(x_ref, w1_ref, b1_ref, w2_ref, b2_ref, w3_ref, b3_ref, o_ref):
    # x_ref: [S+A, TB] (batch on lanes).  Weights are [out, in]; biases [out, 1].
    x = x_ref[...]
    h1 = jnp.dot(w1_ref[...], x, preferred_element_type=jnp.float32) + b1_ref[...]
    h1 = jnp.maximum(h1, 0.0)                                         # ReLU
    h2 = jnp.dot(w2_ref[...], h1, preferred_element_type=jnp.float32) + b2_ref[...]
    h2 = jnp.maximum(h2, 0.0)                                         # ReLU
    o_ref[...] = (jnp.dot(w3_ref[...], h2, preferred_element_type=jnp.float32)
                  + b3_ref[...])


def _round_up(x, m):
    return ((x + m - 1) // m) * m


def critic_forward(state, action, params):
    """state: [B, S], action: [B, A]; params: w* as [out, in], b* as [out, 1].

    Returns [B, out] (matches the PyTorch module); internally the kernel works
    on the transposed, lane-dense [feat, B] layout.
    """
    state = state.astype(jnp.float32)
    action = action.astype(jnp.float32)
    B, S = state.shape
    _, A = action.shape

    w1, b1, w2, b2, w3, b3 = (params[k] for k in ("w1", "b1", "w2", "b2", "w3", "b3"))
    h1d, h2d = w1.shape[0], w2.shape[0]
    out_dim = w3.shape[0]
    in_dim = S + A

    # Merge state/action once in the wrapper and present it lane-dense
    # (batch on the last axis).  Layout plumbing only — no per-row HBM cost
    # beyond one cheap pass.
    x_t = jnp.concatenate([state, action], axis=1).T      # [S+A, B]

    # Batch tile: full batch for small B (block == full array dims), otherwise
    # a large multiple-of-128 lane tile with >= ~4 grid steps so v7x's two
    # TensorCores each keep >= 2 steps of DMA/compute overlap.
    if B <= 512:
        TB = B
    else:
        TB = min(8192, max(512, _round_up(pl.cdiv(B, 4), 128)))
    grid = (pl.cdiv(B, TB),)

    def stream_spec(rows):
        # Streamed along the lane (batch) axis.
        return pl.BlockSpec((rows, TB), lambda i: (0, i))

    def resident_spec(shape):
        # Constant block index across the grid -> fetched once, VMEM-resident.
        return pl.BlockSpec(shape, lambda i: (0, 0))

    param_bytes = 4 * sum(int(p.size) for p in (w1, b1, w2, b2, w3, b3))
    flops = 2 * B * (in_dim * h1d + h1d * h2d + h2d * out_dim)
    bytes_accessed = 4 * B * (in_dim + out_dim) + param_bytes

    # Actual VMEM footprint: double-buffered in/out tiles + live intermediates
    # + resident params, with 2x slack; well under 32 MiB on all generations.
    stream_bytes = 2 * 4 * TB * (in_dim + out_dim)
    interm_bytes = 4 * TB * (in_dim + h1d + h2d + out_dim)
    vmem_limit = int(min(32 * 1024 * 1024,
                         max(4 * 1024 * 1024,
                             2 * (stream_bytes + interm_bytes + param_bytes))))

    out_t = pl.pallas_call(
        critic_kernel,
        out_shape=jax.ShapeDtypeStruct((out_dim, B), jnp.float32),
        grid=grid,
        in_specs=[
            stream_spec(in_dim),                 # x^T tile, streamed
            resident_spec(w1.shape), resident_spec(b1.shape),
            resident_spec(w2.shape), resident_spec(b2.shape),
            resident_spec(w3.shape), resident_spec(b3.shape),
        ],
        out_specs=stream_spec(out_dim),          # lane-dense [out, TB] slab
        compiler_params=pltpu.CompilerParams(
            dimension_semantics=("parallel",),   # shard batch tiles over TCs (v7x)
            vmem_limit_bytes=vmem_limit,
        ),
        cost_estimate=pl.CostEstimate(
            flops=flops, transcendentals=0, bytes_accessed=bytes_accessed),
    )(x_t, w1, b1, w2, b2, w3, b3)

    return out_t.T                               # back to [B, out]


def init_params(key, input_size, output_size):
    """Deterministic init mimicking nn.Linear's U(-1/sqrt(fan_in), 1/sqrt(fan_in)).
    Weights stored as [out, in] (native PyTorch layout); biases as [out, 1]."""
    h1, h2 = 16, 32
    keys = jax.random.split(key, 6)

    def lin(kw, kb, fan_in, fan_out):
        bound = 1.0 / jnp.sqrt(jnp.float32(fan_in))
        w = jax.random.uniform(kw, (fan_out, fan_in), jnp.float32, -bound, bound)
        b = jax.random.uniform(kb, (fan_out, 1), jnp.float32, -bound, bound)
        return w, b

    w1, b1 = lin(keys[0], keys[1], input_size, h1)
    w2, b2 = lin(keys[2], keys[3], h1, h2)
    w3, b3 = lin(keys[4], keys[5], h2, output_size)
    return {"w1": w1, "b1": b1, "w2": w2, "b2": b2, "w3": w3, "b3": b3}


def critic_reference(state, action, params):
    x = jnp.concatenate([state, action], axis=1)
    x = jnp.maximum(x @ params["w1"].T + params["b1"].T, 0.0)
    x = jnp.maximum(x @ params["w2"].T + params["b2"].T, 0.0)
    return x @ params["w3"].T + params["b3"].T


if __name__ == "__main__":
    key = jax.random.PRNGKey(0)
    k_state, k_action, k_params, k_state2, k_action2 = jax.random.split(key, 5)

    state_dim = 6
    action_dim = 2
    input_size = state_dim + action_dim   # = 8
    output_size = 4
    params = init_params(k_params, input_size, output_size)

    # Small-shape case (matches the toy module usage): B=2, single full block.
    batch = 2
    state = jax.random.normal(k_state, (batch, state_dim), jnp.float32)
    action = jax.random.normal(k_action, (batch, action_dim), jnp.float32)

    out = critic_forward(state, action, params)
    jax.block_until_ready(out)
    ref = critic_reference(state, action, params)
    assert out.shape == (batch, output_size)
    assert jnp.allclose(out, ref, atol=1e-5, rtol=1e-5)

    # Larger batch exercises the tiled / pipelined lane-dense path
    # (TB=1024, grid of 4 tiles, >= 2 steps per TensorCore on v7x).
    big_batch = 4096
    state_b = jax.random.normal(k_state2, (big_batch, state_dim), jnp.float32)
    action_b = jax.random.normal(k_action2, (big_batch, action_dim), jnp.float32)

    out_b = critic_forward(state_b, action_b, params)
    jax.block_until_ready(out_b)
    ref_b = critic_reference(state_b, action_b, params)
    assert out_b.shape == (big_batch, output_size)
    assert jnp.allclose(out_b, ref_b, atol=1e-5, rtol=1e-5)

    print("KERNEL_OK")
</pallas_src>

<mosaic_0001>
module attributes {stable_mosaic.version = 11 : i64} {
  func.func @critic_kernel(%arg0: i32, %arg1: memref<8x2xf32, #tpu.memory_space<vmem>>, %arg2: memref<16x8xf32, #tpu.memory_space<vmem>>, %arg3: memref<16x1xf32, #tpu.memory_space<vmem>>, %arg4: memref<32x16xf32, #tpu.memory_space<vmem>>, %arg5: memref<32x1xf32, #tpu.memory_space<vmem>>, %arg6: memref<4x32xf32, #tpu.memory_space<vmem>>, %arg7: memref<4x1xf32, #tpu.memory_space<vmem>>, %arg8: memref<4x2xf32, #tpu.memory_space<vmem>>) attributes {dimension_semantics = [#tpu.dimension_semantics<parallel>], iteration_bounds = array<i64: 1>, scalar_prefetch = 0 : i64, scratch_operands = 0 : i64, tpu.core_type = #tpu.core_type<tc>, window_params = [{transform_indices = @transform_0, window_bounds = array<i64: 8, 2>}, {pipeline_mode = #tpu.pipeline_mode<synchronous>, transform_indices = @transform_1, window_bounds = array<i64: 16, 8>}, {pipeline_mode = #tpu.pipeline_mode<synchronous>, transform_indices = @transform_2, window_bounds = array<i64: 16, 1>}, {pipeline_mode = #tpu.pipeline_mode<synchronous>, transform_indices = @transform_3, window_bounds = array<i64: 32, 16>}, {pipeline_mode = #tpu.pipeline_mode<synchronous>, transform_indices = @transform_4, window_bounds = array<i64: 32, 1>}, {pipeline_mode = #tpu.pipeline_mode<synchronous>, transform_indices = @transform_5, window_bounds = array<i64: 4, 32>}, {pipeline_mode = #tpu.pipeline_mode<synchronous>, transform_indices = @transform_6, window_bounds = array<i64: 4, 1>}, {transform_indices = @transform_7, window_bounds = array<i64: 4, 2>}]} {
    %c0 = arith.constant 0 : index
    %c0_0 = arith.constant 0 : index
    %0 = vector.load %arg1[%c0, %c0_0] : memref<8x2xf32, #tpu.memory_space<vmem>>, vector<8x2xf32>
    %c0_1 = arith.constant 0 : index
    %c0_2 = arith.constant 0 : index
    %1 = vector.load %arg2[%c0_1, %c0_2] : memref<16x8xf32, #tpu.memory_space<vmem>>, vector<16x8xf32>
    %cst = arith.constant dense<0.000000e+00> : vector<16x2xf32>
    %2 = tpu.matmul %1, %0, %cst {dimension_numbers = #tpu.dot_dimension_numbers<[1], [0], [0], [1], [0, 0, 1, 1], [], []>} : vector<16x8xf32>, vector<8x2xf32>, vector<16x2xf32> -> vector<16x2xf32>
    %c0_3 = arith.constant 0 : index
    %c0_4 = arith.constant 0 : index
    %3 = vector.load %arg3[%c0_3, %c0_4] : memref<16x1xf32, #tpu.memory_space<vmem>>, vector<16x1xf32>
    %4 = vector.broadcast %3 : vector<16x1xf32> to vector<16x2xf32>
    %5 = arith.addf %2, %4 : vector<16x2xf32>
    %cst_5 = arith.constant 0.000000e+00 : f32
    %6 = vector.broadcast %cst_5 : f32 to vector<16x2xf32>
    %7 = arith.maximumf %5, %6 : vector<16x2xf32>
    %c0_6 = arith.constant 0 : index
    %c0_7 = arith.constant 0 : index
    %8 = vector.load %arg4[%c0_6, %c0_7] : memref<32x16xf32, #tpu.memory_space<vmem>>, vector<32x16xf32>
    %cst_8 = arith.constant dense<0.000000e+00> : vector<32x2xf32>
    %9 = tpu.matmul %8, %7, %cst_8 {dimension_numbers = #tpu.dot_dimension_numbers<[1], [0], [0], [1], [0, 0, 1, 1], [], []>} : vector<32x16xf32>, vector<16x2xf32>, vector<32x2xf32> -> vector<32x2xf32>
    %c0_9 = arith.constant 0 : index
    %c0_10 = arith.constant 0 : index
    %10 = vector.load %arg5[%c0_9, %c0_10] : memref<32x1xf32, #tpu.memory_space<vmem>>, vector<32x1xf32>
    %11 = vector.broadcast %10 : vector<32x1xf32> to vector<32x2xf32>
    %12 = arith.addf %9, %11 : vector<32x2xf32>
    %cst_11 = arith.constant 0.000000e+00 : f32
    %13 = vector.broadcast %cst_11 : f32 to vector<32x2xf32>
    %14 = arith.maximumf %12, %13 : vector<32x2xf32>
    %c0_12 = arith.constant 0 : index
    %c0_13 = arith.constant 0 : index
    %15 = vector.load %arg6[%c0_12, %c0_13] : memref<4x32xf32, #tpu.memory_space<vmem>>, vector<4x32xf32>
    %cst_14 = arith.constant dense<0.000000e+00> : vector<4x2xf32>
    %16 = tpu.matmul %15, %14, %cst_14 {dimension_numbers = #tpu.dot_dimension_numbers<[1], [0], [0], [1], [0, 0, 1, 1], [], []>} : vector<4x32xf32>, vector<32x2xf32>, vector<4x2xf32> -> vector<4x2xf32>
    %c0_15 = arith.constant 0 : index
    %c0_16 = arith.constant 0 : index
    %17 = vector.load %arg7[%c0_15, %c0_16] : memref<4x1xf32, #tpu.memory_space<vmem>>, vector<4x1xf32>
    %18 = vector.broadcast %17 : vector<4x1xf32> to vector<4x2xf32>
    %19 = arith.addf %16, %18 : vector<4x2xf32>
    %c0_17 = arith.constant 0 : index
    %c0_18 = arith.constant 0 : index
    %20 = vector.load %arg8[%c0_17, %c0_18] : memref<4x2xf32, #tpu.memory_space<vmem>>, vector<4x2xf32>
    tpu.vector_store %arg8[%c0_17, %c0_18], %19 {strides = array<i32>} : memref<4x2xf32, #tpu.memory_space<vmem>>, vector<4x2xf32>,
    return
  }
  func.func @transform_0(%arg0: i32) -> (i32, i32) {
    %c0_i32 = arith.constant 0 : i32
    %c0_i32_0 = arith.constant 0 : i32
    return %c0_i32, %arg0 : i32, i32
  }
  func.func @transform_1(%arg0: i32) -> (i32, i32) {
    %c0_i32 = arith.constant 0 : i32
    %c0_i32_0 = arith.constant 0 : i32
    %c0_i32_1 = arith.constant 0 : i32
    return %c0_i32, %c0_i32_0 : i32, i32
  }
  func.func @transform_2(%arg0: i32) -> (i32, i32) {
    %c0_i32 = arith.constant 0 : i32
    %c0_i32_0 = arith.constant 0 : i32
    %c0_i32_1 = arith.constant 0 : i32
    return %c0_i32, %c0_i32_0 : i32, i32
  }
  func.func @transform_3(%arg0: i32) -> (i32, i32) {
    %c0_i32 = arith.constant 0 : i32
    %c0_i32_0 = arith.constant 0 : i32
    %c0_i32_1 = arith.constant 0 : i32
    return %c0_i32, %c0_i32_0 : i32, i32
  }
  func.func @transform_4(%arg0: i32) -> (i32, i32) {
    %c0_i32 = arith.constant 0 : i32
    %c0_i32_0 = arith.constant 0 : i32
    %c0_i32_1 = arith.constant 0 : i32
    return %c0_i32, %c0_i32_0 : i32, i32
  }
  func.func @transform_5(%arg0: i32) -> (i32, i32) {
    %c0_i32 = arith.constant 0 : i32
    %c0_i32_0 = arith.constant 0 : i32
    %c0_i32_1 = arith.constant 0 : i32
    return %c0_i32, %c0_i32_0 : i32, i32
  }
  func.func @transform_6(%arg0: i32) -> (i32, i32) {
    %c0_i32 = arith.constant 0 : i32
    %c0_i32_0 = arith.constant 0 : i32
    %c0_i32_1 = arith.constant 0 : i32
    return %c0_i32, %c0_i32_0 : i32, i32
  }
  func.func @transform_7(%arg0: i32) -> (i32, i32) {
    %c0_i32 = arith.constant 0 : i32
    %c0_i32_0 = arith.constant 0 : i32
    return %c0_i32, %arg0 : i32, i32
  }
}

</mosaic_0001>

<llo_original>
// kernel: tpu_custom_call.1
$region0: #{tpu_custom_call.1}
  #allocation0 [shape = 'u32[]', space=smem, size = 0x4, offset = 0x4, fixed_abs, tag = 'smem constant byte address 0x4 - core index']
  #allocation1 [shape = 'u32[144,128]{1,0:T(1,128)}', space=vmem, size = 0x12000, scoped, tag = 'internal scratch']
  %s0 = inlined_call_operand.vmem [shape: f32[8,2], index: 0, kind: input, shape index: {}]
  %s1 = inlined_call_operand.vmem [shape: f32[16,8], index: 1, kind: input, shape index: {}]
  %s2 = inlined_call_operand.vmem [shape: f32[16,1], index: 2, kind: input, shape index: {}]
  %s3 = inlined_call_operand.vmem [shape: f32[32,16], index: 3, kind: input, shape index: {}]
  %s4 = inlined_call_operand.vmem [shape: f32[32,1], index: 4, kind: input, shape index: {}]
  %s5 = inlined_call_operand.vmem [shape: f32[4,32], index: 5, kind: input, shape index: {}]
  %s6 = inlined_call_operand.vmem [shape: f32[4,1], index: 6, kind: input, shape index: {}]
  %s7 = inlined_call_operand.vmem [shape: f32[4,2], index: 7, kind: output, shape index: {}]
  %s8 = sld [smem:[#allocation0]]
  $region38: #{tpu_custom_call.1} parent=0
    _
  %s10 = ssub.s32 1, %s8
  %s11 = scalar_select 0, %s10, %s8
  // Predicated region
  $region2: #{tpu_custom_call.1} parent=0 // pred_check
    _
  $region3: #{tpu_custom_call.1} parent=0 // pred_check_branch
    %13 = sbr.rel (0) target = $region5
  $region4: #{tpu_custom_call.1} parent=0 // pred_region
    _
  $region5: #{tpu_custom_call.1} parent=0 // pred_fallthru
    _
  // Predicated region
  $region6: #{tpu_custom_call.1} parent=0 // pred_check
    _
  $region7: #{tpu_custom_call.1} parent=0 // pred_check_branch
    %15 = sbr.rel (0) target = $region9
  $region8: #{tpu_custom_call.1} parent=0 // pred_region
    _
  $region9: #{tpu_custom_call.1} parent=0 // pred_fallthru
    _
  // Predicated region
  $region10: #{tpu_custom_call.1} parent=0 // pred_check
    _
  $region11: #{tpu_custom_call.1} parent=0 // pred_check_branch
    %17 = sbr.rel (0) target = $region13
  $region12: #{tpu_custom_call.1} parent=0 // pred_region
    _
  $region13: #{tpu_custom_call.1} parent=0 // pred_fallthru
    _
  // Predicated region
  $region14: #{tpu_custom_call.1} parent=0 // pred_check
    _
  $region15: #{tpu_custom_call.1} parent=0 // pred_check_branch
    %19 = sbr.rel (0) target = $region17
  $region16: #{tpu_custom_call.1} parent=0 // pred_region
    _
  $region17: #{tpu_custom_call.1} parent=0 // pred_fallthru
    _
  // Predicated region
  $region18: #{tpu_custom_call.1} parent=0 // pred_check
    _
  $region19: #{tpu_custom_call.1} parent=0 // pred_check_branch
    %21 = sbr.rel (0) target = $region21
  $region20: #{tpu_custom_call.1} parent=0 // pred_region
    _
  $region21: #{tpu_custom_call.1} parent=0 // pred_fallthru
    _
  // Predicated region
  $region22: #{tpu_custom_call.1} parent=0 // pred_check
    _
  $region23: #{tpu_custom_call.1} parent=0 // pred_check_branch
    %23 = sbr.rel (0) target = $region25
  $region24: #{tpu_custom_call.1} parent=0 // pred_region
    _
  $region25: #{tpu_custom_call.1} parent=0 // pred_fallthru
    _
  // Predicated region
  $region26: #{tpu_custom_call.1} parent=0 // pred_check
    _
  $region27: #{tpu_custom_call.1} parent=0 // pred_check_branch
    %25 = sbr.rel (0) target = $region29
  $region28: #{tpu_custom_call.1} parent=0 // pred_region
    _
  $region29: #{tpu_custom_call.1} parent=0 // pred_fallthru
    _
  %v26 = vld [vmem:[%s0] sm:$0xff]
  %v27 = vld [vmem:[%s1] sm:$0xff]
  %v28 = vld [vmem:[%s1 + $0x8] sm:$0xff]
  %v29 = vld [vmem:[%s2] sm:$0xff]
  %v30 = vld [vmem:[%s2 + $0x8] sm:$0xff]
  %32 = vset.pattern.permute.xlu0 0
  %33 = vperm.xlu0 %32, %v29
  %v34 = vpop.permute.xlu0 %33
  %37 = vset.pattern.permute.xlu0 0
  %38 = vperm.xlu0 %37, %v30
  %v39 = vpop.permute.xlu0 %38
  %vm41 = vcmask 64512
  %v43 = vsel %vm41, %v27, 0
  %v46 = vsel %vm41, %v28, 0
  %48 = vmatprep.subr.mxu0 0.0
  %49 = vmatpush1.msra.mxu0 %v26
  %50 = vmatprep.subr.mxu0 0.0
  %51 = vmatpush1.msra.mxu0 0.0
  %52 = vmatprep.subr.mxu0 0.0
  %53 = vmatpush1.msra.mxu0 0.0
  %54 = vmatprep.subr.mxu0 0.0
  %55 = vmatpush1.msra.mxu0 0.0
  %56 = vmatprep.subr.mxu0 0.0
  %57 = vmatpush1.msra.mxu0 0.0
  %58 = vmatprep.subr.mxu0 0.0
  %59 = vmatpush1.msra.mxu0 0.0
  %60 = vmatprep.subr.mxu0 0.0
  %61 = vmatpush1.msra.mxu0 0.0
  %62 = vmatprep.subr.mxu0 0.0
  %63 = vmatpush1.msra.mxu0 0.0
  %64 = vmatprep.subr.mxu0 0.0
  %65 = vmatpush1.msra.mxu0 0.0
  %66 = vmatprep.subr.mxu0 0.0
  %67 = vmatpush1.msra.mxu0 0.0
  %68 = vmatprep.subr.mxu0 0.0
  %69 = vmatpush1.msra.mxu0 0.0
  %70 = vmatprep.subr.mxu0 0.0
  %71 = vmatpush1.msra.mxu0 0.0
  %72 = vmatprep.subr.mxu0 0.0
  %73 = vmatpush1.msra.mxu0 0.0
  %74 = vmatprep.subr.mxu0 0.0
  %75 = vmatpush1.msra.mxu0 0.0
  %76 = vmatprep.subr.mxu0 0.0
  %77 = vmatpush1.msra.mxu0 0.0
  %78 = vmatprep.subr.mxu0 0.0
  %79 = vmatpush1.msra.mxu0 0.0
  %80 = vmatprep.subr.mxu0 0.0
  %81 = vmatpush1.msra.mxu0 0.0
  %82 = vmatprep.subr.mxu0 0.0
  %83 = vmatpush1.msra.mxu0 0.0
  %84 = vmatprep.subr.mxu0 0.0
  %85 = vmatpush1.msra.mxu0 0.0
  %86 = vmatprep.subr.mxu0 0.0
  %87 = vmatpush1.msra.mxu0 0.0
  %88 = vmatprep.subr.mxu0 0.0
  %89 = vmatpush1.msra.mxu0 0.0
  %90 = vmatprep.subr.mxu0 0.0
  %91 = vmatpush1.msra.mxu0 0.0
  %92 = vmatprep.subr.mxu0 0.0
  %93 = vmatpush1.msra.mxu0 0.0
  %94 = vmatprep.subr.mxu0 0.0
  %95 = vmatpush1.msra.mxu0 0.0
  %96 = vmatprep.subr.mxu0 0.0
  %97 = vmatpush1.msra.mxu0 0.0
  %98 = vmatprep.subr.mxu0 0.0
  %99 = vmatpush1.msra.mxu0 0.0
  %100 = vmatprep.subr.mxu0 0.0
  %101 = vmatpush1.msra.mxu0 0.0
  %102 = vmatprep.subr.mxu0 0.0
  %103 = vmatpush1.msra.mxu0 0.0
  %104 = vmatprep.subr.mxu0 0.0
  %105 = vmatpush1.msra.mxu0 0.0
  %106 = vmatprep.subr.mxu0 0.0
  %107 = vmatpush1.msra.mxu0 0.0
  %108 = vmatprep.subr.mxu0 0.0
  %109 = vmatpush1.msra.mxu0 0.0
  %110 = vmatprep.subr.mxu0 0.0
  %111 = vmatpush1.msra.mxu0 0.0
  %112 = vmatprep.mubr.f32.mxu0 0.0
  %113 = vmatmul.mubr.f32.gmra.mrb[0].mxu0 %v43
  %v114 = vpop.f32.mrb[0].mxu0
  %v115 = vadd.f32 %v34, %v114
  %v116 = vpop.f32.mrb[0].mxu0
  %117 = vmatprep.mubr.f32.mxu0 0.0
  %118 = vmatmul.mubr.f32.gmra.mrb[0].mxu0 %v46
  %v119 = vpop.f32.mrb[0].mxu0
  %v120 = vadd.f32 %v39, %v119
  %v121 = vpop.f32.mrb[0].mxu0
  %122 = vdwg.mxu0
  %v123 = vmax.f32 %v115, 0.0
  %v124 = vmax.f32 %v120, 0.0
  %v125 = vld [vmem:[%s3] sm:$0xff]
  %v126 = vld [vmem:[%s3 + $0x8] sm:$0xff]
  %v127 = vld [vmem:[%s3 + $0x10] sm:$0xff]
  %v128 = vld [vmem:[%s3 + $0x18] sm:$0xff]
  %v129 = vld [vmem:[%s4] sm:$0xff]
  %v130 = vld [vmem:[%s4 + $0x8] sm:$0xff]
  %v131 = vld [vmem:[%s4 + $0x10] sm:$0xff]
  %v132 = vld [vmem:[%s4 + $0x18] sm:$0xff]
  %134 = vset.pattern.permute.xlu0 0
  %135 = vperm.xlu0 %134, %v129
  %v136 = vpop.permute.xlu0 %135
  %139 = vset.pattern.permute.xlu0 0
  %140 = vperm.xlu0 %139, %v130
  %v141 = vpop.permute.xlu0 %140
  %144 = vset.pattern.permute.xlu0 0
  %145 = vperm.xlu0 %144, %v131
  %v146 = vpop.permute.xlu0 %145
  %149 = vset.pattern.permute.xlu0 0
  %150 = vperm.xlu0 %149, %v132
  %v151 = vpop.permute.xlu0 %150
  %vm153 = vcmask 130048
  %v155 = vsel %vm153, %v125, 0
  %v158 = vsel %vm153, %v126, 0
  %v161 = vsel %vm153, %v127, 0
  %v164 = vsel %vm153, %v128, 0
  %166 = vmatprep.subr.mxu0 0.0
  %167 = vmatpush1.msra.mxu0 %v123
  %168 = vmatprep.subr.mxu0 0.0
  %169 = vmatpush1.msra.mxu0 %v124
  %170 = vmatprep.subr.mxu0 0.0
  %171 = vmatpush1.msra.mxu0 0.0
  %172 = vmatprep.subr.mxu0 0.0
  %173 = vmatpush1.msra.mxu0 0.0
  %174 = vmatprep.subr.mxu0 0.0
  %175 = vmatpush1.msra.mxu0 0.0
  %176 = vmatprep.subr.mxu0 0.0
  %177 = vmatpush1.msra.mxu0 0.0
  %178 = vmatprep.subr.mxu0 0.0
  %179 = vmatpush1.msra.mxu0 0.0
  %180 = vmatprep.subr.mxu0 0.0
  %181 = vmatpush1.msra.mxu0 0.0
  %182 = vmatprep.subr.mxu0 0.0
  %183 = vmatpush1.msra.mxu0 0.0
  %184 = vmatprep.subr.mxu0 0.0
  %185 = vmatpush1.msra.mxu0 0.0
  %186 = vmatprep.subr.mxu0 0.0
  %187 = vmatpush1.msra.mxu0 0.0
  %188 = vmatprep.subr.mxu0 0.0
  %189 = vmatpush1.msra.mxu0 0.0
  %190 = vmatprep.subr.mxu0 0.0
  %191 = vmatpush1.msra.mxu0 0.0
  %192 = vmatprep.subr.mxu0 0.0
  %193 = vmatpush1.msra.mxu0 0.0
  %194 = vmatprep.subr.mxu0 0.0
  %195 = vmatpush1.msra.mxu0 0.0
  %196 = vmatprep.subr.mxu0 0.0
  %197 = vmatpush1.msra.mxu0 0.0
  %198 = vmatprep.subr.mxu0 0.0
  %199 = vmatpush1.msra.mxu0 0.0
  %200 = vmatprep.subr.mxu0 0.0
  %201 = vmatpush1.msra.mxu0 0.0
  %202 = vmatprep.subr.mxu0 0.0
  %203 = vmatpush1.msra.mxu0 0.0
  %204 = vmatprep.subr.mxu0 0.0
  %205 = vmatpush1.msra.mxu0 0.0
  %206 = vmatprep.subr.mxu0 0.0
  %207 = vmatpush1.msra.mxu0 0.0
  %208 = vmatprep.subr.mxu0 0.0
  %209 = vmatpush1.msra.mxu0 0.0
  %210 = vmatprep.subr.mxu0 0.0
  %211 = vmatpush1.msra.mxu0 0.0
  %212 = vmatprep.subr.mxu0 0.0
  %213 = vmatpush1.msra.mxu0 0.0
  %214 = vmatprep.subr.mxu0 0.0
  %215 = vmatpush1.msra.mxu0 0.0
  %216 = vmatprep.subr.mxu0 0.0
  %217 = vmatpush1.msra.mxu0 0.0
  %218 = vmatprep.subr.mxu0 0.0
  %219 = vmatpush1.msra.mxu0 0.0
  %220 = vmatprep.subr.mxu0 0.0
  %221 = vmatpush1.msra.mxu0 0.0
  %222 = vmatprep.subr.mxu0 0.0
  %223 = vmatpush1.msra.mxu0 0.0
  %224 = vmatprep.subr.mxu0 0.0
  %225 = vmatpush1.msra.mxu0 0.0
  %226 = vmatprep.subr.mxu0 0.0
  %227 = vmatpush1.msra.mxu0 0.0
  %228 = vmatprep.subr.mxu0 0.0
  %229 = vmatpush1.msra.mxu0 0.0
  %230 = vmatprep.mubr.f32.mxu0 0.0
  %231 = vmatmul.mubr.f32.gmra.mrb[0].mxu0 %v155
  %v232 = vpop.f32.mrb[0].mxu0
  %v233 = vadd.f32 %v136, %v232
  %v234 = vpop.f32.mrb[0].mxu0
  %235 = vmatprep.mubr.f32.mxu0 0.0
  %236 = vmatmul.mubr.f32.gmra.mrb[0].mxu0 %v158
  %v237 = vpop.f32.mrb[0].mxu0
  %v238 = vadd.f32 %v141, %v237
  %v239 = vpop.f32.mrb[0].mxu0
  %240 = vmatprep.mubr.f32.mxu0 0.0
  %241 = vmatmul.mubr.f32.gmra.mrb[0].mxu0 %v161
  %v242 = vpop.f32.mrb[0].mxu0
  %v243 = vadd.f32 %v146, %v242
  %v244 = vpop.f32.mrb[0].mxu0
  %245 = vmatprep.mubr.f32.mxu0 0.0
  %246 = vmatmul.mubr.f32.gmra.mrb[0].mxu0 %v164
  %v247 = vpop.f32.mrb[0].mxu0
  %v248 = vadd.f32 %v151, %v247
  %v249 = vpop.f32.mrb[0].mxu0
  %250 = vdwg.mxu0
  %v251 = vmax.f32 %v233, 0.0
  %v252 = vmax.f32 %v238, 0.0
  %v253 = vmax.f32 %v243, 0.0
  %v254 = vmax.f32 %v248, 0.0
  %v255 = vld [vmem:[%s5] sm:$0xf]
  %v256 = vld [vmem:[%s6] sm:$0xf]
  %258 = vset.pattern.permute.xlu0 0
  %259 = vperm.xlu0 %258, %v256
  %v260 = vpop.permute.xlu0 %259
  %vm262 = vcmask 261120
  %v264 = vsel %vm262, %v255, 0
  %266 = vmatprep.subr.mxu0 0.0
  %267 = vmatpush1.msra.mxu0 %v251
  %268 = vmatprep.subr.mxu0 0.0
  %269 = vmatpush1.msra.mxu0 %v252
  %270 = vmatprep.subr.mxu0 0.0
  %271 = vmatpush1.msra.mxu0 %v253
  %272 = vmatprep.subr.mxu0 0.0
  %273 = vmatpush1.msra.mxu0 %v254
  %274 = vmatprep.subr.mxu0 0.0
  %275 = vmatpush1.msra.mxu0 0.0
  %276 = vmatprep.subr.mxu0 0.0
  %277 = vmatpush1.msra.mxu0 0.0
  %278 = vmatprep.subr.mxu0 0.0
  %279 = vmatpush1.msra.mxu0 0.0
  %280 = vmatprep.subr.mxu0 0.0
  %281 = vmatpush1.msra.mxu0 0.0
  %282 = vmatprep.subr.mxu0 0.0
  %283 = vmatpush1.msra.mxu0 0.0
  %284 = vmatprep.subr.mxu0 0.0
  %285 = vmatpush1.msra.mxu0 0.0
  %286 = vmatprep.subr.mxu0 0.0
  %287 = vmatpush1.msra.mxu0 0.0
  %288 = vmatprep.subr.mxu0 0.0
  %289 = vmatpush1.msra.mxu0 0.0
  %290 = vmatprep.subr.mxu0 0.0
  %291 = vmatpush1.msra.mxu0 0.0
  %292 = vmatprep.subr.mxu0 0.0
  %293 = vmatpush1.msra.mxu0 0.0
  %294 = vmatprep.subr.mxu0 0.0
  %295 = vmatpush1.msra.mxu0 0.0
  %296 = vmatprep.subr.mxu0 0.0
  %297 = vmatpush1.msra.mxu0 0.0
  %298 = vmatprep.subr.mxu0 0.0
  %299 = vmatpush1.msra.mxu0 0.0
  %300 = vmatprep.subr.mxu0 0.0
  %301 = vmatpush1.msra.mxu0 0.0
  %302 = vmatprep.subr.mxu0 0.0
  %303 = vmatpush1.msra.mxu0 0.0
  %304 = vmatprep.subr.mxu0 0.0
  %305 = vmatpush1.msra.mxu0 0.0
  %306 = vmatprep.subr.mxu0 0.0
  %307 = vmatpush1.msra.mxu0 0.0
  %308 = vmatprep.subr.mxu0 0.0
  %309 = vmatpush1.msra.mxu0 0.0
  %310 = vmatprep.subr.mxu0 0.0
  %311 = vmatpush1.msra.mxu0 0.0
  %312 = vmatprep.subr.mxu0 0.0
  %313 = vmatpush1.msra.mxu0 0.0
  %314 = vmatprep.subr.mxu0 0.0
  %315 = vmatpush1.msra.mxu0 0.0
  %316 = vmatprep.subr.mxu0 0.0
  %317 = vmatpush1.msra.mxu0 0.0
  %318 = vmatprep.subr.mxu0 0.0
  %319 = vmatpush1.msra.mxu0 0.0
  %320 = vmatprep.subr.mxu0 0.0
  %321 = vmatpush1.msra.mxu0 0.0
  %322 = vmatprep.subr.mxu0 0.0
  %323 = vmatpush1.msra.mxu0 0.0
  %324 = vmatprep.subr.mxu0 0.0
  %325 = vmatpush1.msra.mxu0 0.0
  %326 = vmatprep.subr.mxu0 0.0
  %327 = vmatpush1.msra.mxu0 0.0
  %328 = vmatprep.subr.mxu0 0.0
  %329 = vmatpush1.msra.mxu0 0.0
  %330 = vmatprep.mubr.f32.mxu0 0.0
  %331 = vmatmul.mubr.f32.gmra.mrb[0].mxu0 %v264
  %v332 = vpop.f32.mrb[0].mxu0
  %v333 = vadd.f32 %v260, %v332
  %v334 = vpop.f32.mrb[0].mxu0
  %335 = vdwg.mxu0
  %vm336 = vcmask 11264
  %337 = vst.msk [vmem:[%s7] sm:$0xf] %vm336, %v333
  // Predicated region
  $region30: #{tpu_custom_call.1} parent=0 // pred_check
    _
  $region31: #{tpu_custom_call.1} parent=0 // pred_check_branch
    %339 = sbr.rel (0) target = $region33
  $region32: #{tpu_custom_call.1} parent=0 // pred_region
    _
  $region33: #{tpu_custom_call.1} parent=0 // pred_fallthru
    _
  // Predicated region
  $region34: #{tpu_custom_call.1} parent=0 // pred_check
    _
  $region35: #{tpu_custom_call.1} parent=0 // pred_check_branch
    %341 = sbr.rel (0) target = $region37
  $region36: #{tpu_custom_call.1} parent=0 // pred_region
    _
  $region37: #{tpu_custom_call.1} parent=0 // pred_fallthru
    _

</llo_original>
